<compile_context>
chip_gen: v6e
topology: v6e:2x2x1
jax: 0.10.0
libtpu: 0.0.40
codegen_flags: <defaults>
</compile_context>

<pallas_src>
import functools

import jax
import jax.numpy as jnp
from jax.experimental import pallas as pl
from jax.experimental.pallas import tpu as pltpu

_LANES = 128


# --------------------------------------------------------------------------- #
# Kernels
# --------------------------------------------------------------------------- #
def _se_gate_kernel(x_ref, w1_ref, w2t_ref, gate_ref, z_ref, acc_ref, *,
                    valid_rows, inv_count):
    """Fused squeeze+excitation gate.

    Grid axis 0 ("arbitrary") streams row tiles of the lane-dense view of x,
    accumulating per-lane sums into a resident VMEM scratch.  The final grid
    step computes mean -> Linear -> ReLU -> Linear -> Softmax(singleton dim)
    and writes the (1, C) gate and pre-softmax logits z.
    """
    i = pl.program_id(0)
    nsteps = pl.num_programs(0)

    @pl.when(i == 0)
    def _init():
        acc_ref[...] = jnp.zeros_like(acc_ref)

    xb = x_ref[...].astype(jnp.float32)                    # (tile, cols)
    tile_rows = x_ref.shape[0]
    if valid_rows % tile_rows != 0:
        # cdiv grid: mask rows of the (only) partial edge block.
        rid = jax.lax.broadcasted_iota(jnp.int32, xb.shape, 0)
        xb = jnp.where(i * tile_rows + rid < valid_rows, xb, 0.0)
    acc_ref[...] += jnp.sum(xb, axis=0, keepdims=True)     # (1, cols)

    @pl.when(i == nsteps - 1)
    def _finalize():
        # Per-lane pooled means.  In the lane-folded view lane l holds channel
        # (l % C); w1_ref is lane-tiled to match, so the lane reduction below
        # is exactly w1 @ mean(x) regardless of folding.
        y = acc_ref[...] * inv_count                       # (1, cols)
        h = jnp.sum(w1_ref[...] * y, axis=1, keepdims=True)        # (Cr, 1)
        h = jnp.maximum(h, 0.0)                                    # ReLU
        z = jnp.sum(w2t_ref[...] * h, axis=0, keepdims=True)       # (1, C)
        # nn.Softmax() on the (1,1,C) pooled tensor -> implicit dim=0 (size 1).
        m = z                        # max over the singleton softmax axis
        e = jnp.exp(z - m)           # == 1 for finite z
        gate = e / e                 # sum over the singleton axis == e
        z_ref[...] = z
        gate_ref[...] = gate


def _scale_kernel(x_ref, g_ref, o_ref):
    """Elementwise gating: out = x * gate (gate broadcast over rows)."""
    o_ref[...] = (x_ref[...] * g_ref[...]).astype(o_ref.dtype)


# --------------------------------------------------------------------------- #
# Tiling helpers
# --------------------------------------------------------------------------- #
def _vmem_capacity_bytes():
    """Physical per-core VMEM; conservative 64 MiB (v7x) fallback."""
    try:
        cap = int(pltpu.get_tpu_info().vmem_capacity_bytes)
        if cap > 0:
            return cap
    except Exception:
        pass
    return 64 << 20


def _lane_view(H, W, C):
    """Lane-dense 2-D view of x.  Returns (rows, cols, fold): lane l <-> channel l % C."""
    total = H * W * C
    if C % _LANES == 0:
        return H * W, C, 1                       # already lane-dense
    if _LANES % C == 0 and total % _LANES == 0:
        return total // _LANES, _LANES, _LANES // C   # fold channels into lanes
    # TODO(synk): periodic lane-dense view (period lcm(C,128)//128 rows) for C
    # not dividing 128; only matters for the optional apply_gate=True path.
    return H * W, C, 1


def _pick_row_tile(rows, cols, itemsize, sublane, max_block_bytes, min_steps=4):
    """Largest sublane-aligned row tile within the VMEM byte budget.

    Prefers a divisor of `rows` (no edge masking); otherwise returns a capped
    tile for a cdiv grid (the reduction kernel masks the partial edge block).
    Keeps >= min_steps grid steps when rows allow (pipeline overlap + v7x
    megacore split of the "parallel" gating pass).
    """
    row_bytes = max(1, cols * itemsize)
    cap = max(sublane, (max_block_bytes // row_bytes) // sublane * sublane)
    if rows // min_steps >= sublane:
        cap = min(cap, (rows // min_steps) // sublane * sublane)
    if rows <= cap:
        return rows                              # full-extent block is always legal
    t = cap
    while t >= sublane:
        if rows % t == 0:
            return t
        t -= sublane
    return cap                                   # cdiv grid + in-kernel row mask


def _budgets(rows, cols, itemsize):
    sublane = max(8, 32 // itemsize)             # 8 f32, 16 bf16, 32 int8/fp8
    vmem_cap = _vmem_capacity_bytes()
    target_block = max(1 << 20, min(4 << 20, vmem_cap // 32))   # ~2 MiB v7x, 4 MiB v5e/v6e
    max_block = min(target_block, (vmem_cap // 2) // 6)         # ~6 live blocks <= half VMEM
    tile = _pick_row_tile(rows, cols, itemsize, sublane, max_block)
    block_bytes = tile * cols * itemsize
    vmem_limit = int(min(0.8 * vmem_cap, max(16 << 20, 8 * block_bytes + (2 << 20))))
    return tile, vmem_limit


# --------------------------------------------------------------------------- #
# Wrappers
# --------------------------------------------------------------------------- #
@jax.jit
def se_gate(x, w1, w2):
    """Fused SE gate: AdaptiveAvgPool2d(1) + Linear + ReLU + Linear + Softmax.

    x : (H, W, C) activations.
    w1: (C//r, C)  -- nn.Linear(channel, channel//r).weight
    w2: (C, C//r)  -- nn.Linear(channel//r, channel).weight
    Returns (gate, z): gate (C,) softmax output, z (C,) pre-softmax logits
    (z is exposed so the fused reduction/FC path can be verified).
    """
    H, W, C = x.shape
    Cr = w1.shape[0]
    rows, cols, fold = _lane_view(H, W, C)
    x2 = x.reshape(rows, cols)

    w1f = w1.astype(jnp.float32)
    if fold > 1:
        w1f = jnp.tile(w1f, (1, fold))           # lane l <-> channel l % C
    w2t = w2.astype(jnp.float32).T               # (Cr, C)

    tile, vmem_limit = _budgets(rows, cols, x.dtype.itemsize)
    grid = (pl.cdiv(rows, tile),)

    kernel = functools.partial(_se_gate_kernel, valid_rows=rows,
                               inv_count=1.0 / float(H * W))

    gate, z = pl.pallas_call(
        kernel,
        out_shape=(jax.ShapeDtypeStruct((1, C), jnp.float32),
                   jax.ShapeDtypeStruct((1, C), jnp.float32)),
        grid=grid,
        in_specs=[
            pl.BlockSpec((tile, cols), lambda i: (i, 0)),
            pl.BlockSpec((Cr, cols), lambda i: (0, 0)),   # resident small weights
            pl.BlockSpec((Cr, C), lambda i: (0, 0)),
        ],
        out_specs=[
            pl.BlockSpec((1, C), lambda i: (0, 0)),
            pl.BlockSpec((1, C), lambda i: (0, 0)),
        ],
        scratch_shapes=[pltpu.VMEM((1, cols), jnp.float32)],
        compiler_params=pltpu.CompilerParams(
            dimension_semantics=("arbitrary",),
            vmem_limit_bytes=vmem_limit),
    )(x2, w1f, w2t)
    return gate[0], z[0]


@jax.jit
def _apply_gate(x, gate):
    """Literal `x * gate.expand_as(x)` pass (lane-dense, 'parallel' grid)."""
    H, W, C = x.shape
    rows, cols, fold = _lane_view(H, W, C)
    tile, vmem_limit = _budgets(rows, cols, x.dtype.itemsize)

    if rows % tile != 0:
        # Awkward row counts / C not dividing 128: the plain XLA broadcast
        # multiply is already lane-dense and mem-bound; avoid masked-edge
        # Pallas stores here.
        return x * gate.reshape(1, 1, C).astype(x.dtype)

    gate_lanes = jnp.tile(gate.astype(jnp.float32), fold).reshape(1, cols)
    x2 = x.reshape(rows, cols)

    out2 = pl.pallas_call(
        _scale_kernel,
        out_shape=jax.ShapeDtypeStruct((rows, cols), x.dtype),
        grid=(rows // tile,),
        in_specs=[
            pl.BlockSpec((tile, cols), lambda i: (i, 0)),
            pl.BlockSpec((1, cols), lambda i: (0, 0)),
        ],
        out_specs=pl.BlockSpec((tile, cols), lambda i: (i, 0)),
        compiler_params=pltpu.CompilerParams(
            dimension_semantics=("parallel",),      # v7x: split across both TCs
            vmem_limit_bytes=vmem_limit),
    )(x2, gate_lanes)
    return out2.reshape(H, W, C)


def se_layer(x, w1, w2, *, apply_gate=False):
    """SELayer forward.  Returns (out, gate).

    Default (apply_gate=False): nn.Softmax() on the (1,1,C) pooled tensor uses
    the implicit dim=0 (size 1), so the gate is identically 1.0 and
    x * gate == x bit-exactly for finite activations; the full-size gating
    multiply is elided (saves one HBM read + one HBM write of x).  The gate is
    still computed faithfully by the fused Pallas kernel.
    Set apply_gate=True to run the literal x * gate pass (exact even when the
    gate is non-finite).
    """
    gate, _ = se_gate(x, w1, w2)
    if apply_gate:
        out = _apply_gate(x, gate)
    else:
        out = x
    return out, gate


# --------------------------------------------------------------------------- #
# Self-test
# --------------------------------------------------------------------------- #
if __name__ == "__main__":
    # Shapes consistent with the module: channel=64, reduction=16.
    H, W, C, reduction = 64, 64, 64, 16
    Cr = C // reduction

    key = jax.random.PRNGKey(0)
    kx, k1, k2, kx2, k3, k4 = jax.random.split(key, 6)
    x = jax.random.normal(kx, (H, W, C), dtype=jnp.float32)

    # nn.Linear default init U(-1/sqrt(fan_in), 1/sqrt(fan_in)), bias=False.
    b1, b2 = 1.0 / C ** 0.5, 1.0 / Cr ** 0.5
    w1 = jax.random.uniform(k1, (Cr, C), jnp.float32, minval=-b1, maxval=b1)
    w2 = jax.random.uniform(k2, (C, Cr), jnp.float32, minval=-b2, maxval=b2)

    # Pure-JAX reference mirroring the PyTorch forward exactly.
    def reference(x, w1, w2):
        y = jnp.mean(x, axis=(0, 1))[None, None, :]          # pooled (1, 1, C)
        h = jnp.maximum(y @ w1.T, 0.0)                        # Linear + ReLU
        z = h @ w2.T                                          # Linear
        gate = jax.nn.softmax(z, axis=0)                      # implicit dim=0 (size 1)
        return x * gate, gate[0, 0], z[0, 0]

    ref_out, ref_gate, ref_z = reference(x, w1, w2)

    # Fused gate kernel: verify pooled-FC logits and the (all-ones) gate.
    gate, z = jax.block_until_ready(se_gate(x, w1, w2))
    assert jnp.allclose(z, ref_z, atol=1e-5, rtol=1e-4), "fused pool+FC mismatch"
    assert jnp.allclose(gate, ref_gate, atol=1e-6), "gate mismatch"

    # Default forward (gating multiply elided: gate == 1 => identity).
    out, _ = se_layer(x, w1, w2)
    out = jax.block_until_ready(out)
    assert out.shape == x.shape and out.dtype == x.dtype
    assert jnp.allclose(out, ref_out, atol=1e-5, rtol=1e-5)

    # Literal gating-multiply path (exercises the Pallas scale kernel).
    out_g, _ = se_layer(x, w1, w2, apply_gate=True)
    out_g = jax.block_until_ready(out_g)
    assert jnp.allclose(out_g, ref_out, atol=1e-5, rtol=1e-5)

    # Fallback shape: C does not divide 128 and H*W (17*17) has no multiple-of-8
    # divisor -> exercises the capped-tile cdiv grid with in-kernel row masking.
    H2, W2, C2 = 17, 17, 48
    Cr2 = C2 // reduction
    xb = jax.random.normal(kx2, (H2, W2, C2), dtype=jnp.float32)
    w1b = jax.random.uniform(k3, (Cr2, C2), jnp.float32,
                             minval=-1.0 / C2 ** 0.5, maxval=1.0 / C2 ** 0.5)
    w2b = jax.random.uniform(k4, (C2, Cr2), jnp.float32,
                             minval=-1.0 / Cr2 ** 0.5, maxval=1.0 / Cr2 ** 0.5)
    refb_out, refb_gate, refb_z = reference(xb, w1b, w2b)
    gb, zb = jax.block_until_ready(se_gate(xb, w1b, w2b))
    assert jnp.allclose(zb, refb_z, atol=1e-5, rtol=1e-4), "fallback pool+FC mismatch"
    assert jnp.allclose(gb, refb_gate, atol=1e-6)
    outb, _ = se_layer(xb, w1b, w2b, apply_gate=True)
    outb = jax.block_until_ready(outb)
    assert jnp.allclose(outb, refb_out, atol=1e-5, rtol=1e-5)

    print("KERNEL_OK")
</pallas_src>

<mosaic_0001>
module attributes {stable_mosaic.version = 11 : i64} {
  func.func @_se_gate_kernel(%arg0: i32, %arg1: memref<512x128xf32, #tpu.memory_space<vmem>>, %arg2: memref<4x128xf32, #tpu.memory_space<vmem>>, %arg3: memref<4x64xf32, #tpu.memory_space<vmem>>, %arg4: memref<1x64xf32, #tpu.memory_space<vmem>>, %arg5: memref<1x64xf32, #tpu.memory_space<vmem>>, %arg6: memref<1x128xf32, #tpu.memory_space<vmem>>) attributes {dimension_semantics = [#tpu.dimension_semantics<arbitrary>], iteration_bounds = array<i64: 4>, scalar_prefetch = 0 : i64, scratch_operands = 1 : i64, tpu.core_type = #tpu.core_type<tc>, window_params = [{transform_indices = @transform_0, window_bounds = array<i64: 512, 128>}, {pipeline_mode = #tpu.pipeline_mode<synchronous>, transform_indices = @transform_1, window_bounds = array<i64: 4, 128>}, {pipeline_mode = #tpu.pipeline_mode<synchronous>, transform_indices = @transform_2, window_bounds = array<i64: 4, 64>}, {pipeline_mode = #tpu.pipeline_mode<synchronous>, transform_indices = @transform_3, window_bounds = array<i64: 1, 64>}, {pipeline_mode = #tpu.pipeline_mode<synchronous>, transform_indices = @transform_4, window_bounds = array<i64: 1, 64>}]} {
    %c0_i32 = arith.constant 0 : i32
    %0 = arith.cmpi eq, %arg0, %c0_i32 : i32
    %1 = arith.extui %0 : i1 to i32
    %c0_i32_0 = arith.constant 0 : i32
    %2 = arith.cmpi ne, %1, %c0_i32_0 : i32
    scf.if %2 {
      %cst_7 = arith.constant 0.000000e+00 : f32
      %12 = vector.broadcast %cst_7 : f32 to vector<1x128xf32>
      %c0_8 = arith.constant 0 : index
      %c0_9 = arith.constant 0 : index
      %13 = vector.load %arg6[%c0_8, %c0_9] : memref<1x128xf32, #tpu.memory_space<vmem>>, vector<1x128xf32>
      tpu.vector_store %arg6[%c0_8, %c0_9], %12 {strides = array<i32>} : memref<1x128xf32, #tpu.memory_space<vmem>>, vector<1x128xf32>,
    } else {
    }
    %c0 = arith.constant 0 : index
    %c0_1 = arith.constant 0 : index
    %3 = vector.load %arg1[%c0, %c0_1] : memref<512x128xf32, #tpu.memory_space<vmem>>, vector<512x128xf32>
    %c0_2 = arith.constant 0 : index
    %c0_3 = arith.constant 0 : index
    %4 = vector.load %arg6[%c0_2, %c0_3] : memref<1x128xf32, #tpu.memory_space<vmem>>, vector<1x128xf32>
    %cst = arith.constant dense<0.000000e+00> : vector<128xf32>
    %5 = vector.multi_reduction <add>, %3, %cst [0] : vector<512x128xf32> to vector<128xf32>
    %6 = vector.shape_cast %5 : vector<128xf32> to vector<1x128xf32>
    %7 = arith.addf %4, %6 : vector<1x128xf32>
    %c0_4 = arith.constant 0 : index
    %c0_5 = arith.constant 0 : index
    %8 = vector.load %arg6[%c0_4, %c0_5] : memref<1x128xf32, #tpu.memory_space<vmem>>, vector<1x128xf32>
    tpu.vector_store %arg6[%c0_4, %c0_5], %7 {strides = array<i32>} : memref<1x128xf32, #tpu.memory_space<vmem>>, vector<1x128xf32>,
    %c3_i32 = arith.constant 3 : i32
    %9 = arith.cmpi eq, %arg0, %c3_i32 : i32
    %10 = arith.extui %9 : i1 to i32
    %c0_i32_6 = arith.constant 0 : i32
    %11 = arith.cmpi ne, %10, %c0_i32_6 : i32
    scf.if %11 {
      %c0_7 = arith.constant 0 : index
      %c0_8 = arith.constant 0 : index
      %12 = vector.load %arg6[%c0_7, %c0_8] : memref<1x128xf32, #tpu.memory_space<vmem>>, vector<1x128xf32>
      %cst_9 = arith.constant 2.44140625E-4 : f32
      %13 = vector.broadcast %cst_9 : f32 to vector<1x128xf32>
      %14 = arith.mulf %12, %13 : vector<1x128xf32>
      %c0_10 = arith.constant 0 : index
      %c0_11 = arith.constant 0 : index
      %15 = vector.load %arg2[%c0_10, %c0_11] : memref<4x128xf32, #tpu.memory_space<vmem>>, vector<4x128xf32>
      %16 = vector.broadcast %14 : vector<1x128xf32> to vector<4x128xf32>
      %17 = arith.mulf %15, %16 : vector<4x128xf32>
      %cst_12 = arith.constant dense<0.000000e+00> : vector<4xf32>
      %18 = vector.multi_reduction <add>, %17, %cst_12 [1] : vector<4x128xf32> to vector<4xf32>
      %19 = vector.shape_cast %18 : vector<4xf32> to vector<4x1xf32>
      %cst_13 = arith.constant 0.000000e+00 : f32
      %20 = vector.broadcast %cst_13 : f32 to vector<4x1xf32>
      %21 = arith.maximumf %19, %20 : vector<4x1xf32>
      %c0_14 = arith.constant 0 : index
      %c0_15 = arith.constant 0 : index
      %22 = vector.load %arg3[%c0_14, %c0_15] : memref<4x64xf32, #tpu.memory_space<vmem>>, vector<4x64xf32>
      %23 = vector.broadcast %21 : vector<4x1xf32> to vector<4x64xf32>
      %24 = arith.mulf %22, %23 : vector<4x64xf32>
      %cst_16 = arith.constant dense<0.000000e+00> : vector<64xf32>
      %25 = vector.multi_reduction <add>, %24, %cst_16 [0] : vector<4x64xf32> to vector<64xf32>
      %26 = vector.shape_cast %25 : vector<64xf32> to vector<1x64xf32>
      %27 = arith.subf %26, %26 : vector<1x64xf32>
      %28 = math.exp %27 : vector<1x64xf32>
      %29 = arith.divf %28, %28 : vector<1x64xf32>
      %c0_17 = arith.constant 0 : index
      %c0_18 = arith.constant 0 : index
      %30 = vector.load %arg5[%c0_17, %c0_18] : memref<1x64xf32, #tpu.memory_space<vmem>>, vector<1x64xf32>
      tpu.vector_store %arg5[%c0_17, %c0_18], %26 {strides = array<i32>} : memref<1x64xf32, #tpu.memory_space<vmem>>, vector<1x64xf32>,
      %c0_19 = arith.constant 0 : index
      %c0_20 = arith.constant 0 : index
      %31 = vector.load %arg4[%c0_19, %c0_20] : memref<1x64xf32, #tpu.memory_space<vmem>>, vector<1x64xf32>
      tpu.vector_store %arg4[%c0_19, %c0_20], %29 {strides = array<i32>} : memref<1x64xf32, #tpu.memory_space<vmem>>, vector<1x64xf32>,
    } else {
    }
    return
  }
  func.func @transform_0(%arg0: i32) -> (i32, i32) {
    %c0_i32 = arith.constant 0 : i32
    %c0_i32_0 = arith.constant 0 : i32
    return %arg0, %c0_i32 : i32, i32
  }
  func.func @transform_1(%arg0: i32) -> (i32, i32) {
    %c0_i32 = arith.constant 0 : i32
    %c0_i32_0 = arith.constant 0 : i32
    %c0_i32_1 = arith.constant 0 : i32
    return %c0_i32, %c0_i32_0 : i32, i32
  }
  func.func @transform_2(%arg0: i32) -> (i32, i32) {
    %c0_i32 = arith.constant 0 : i32
    %c0_i32_0 = arith.constant 0 : i32
    %c0_i32_1 = arith.constant 0 : i32
    return %c0_i32, %c0_i32_0 : i32, i32
  }
  func.func @transform_3(%arg0: i32) -> (i32, i32) {
    %c0_i32 = arith.constant 0 : i32
    %c0_i32_0 = arith.constant 0 : i32
    %c0_i32_1 = arith.constant 0 : i32
    return %c0_i32, %c0_i32_0 : i32, i32
  }
  func.func @transform_4(%arg0: i32) -> (i32, i32) {
    %c0_i32 = arith.constant 0 : i32
    %c0_i32_0 = arith.constant 0 : i32
    %c0_i32_1 = arith.constant 0 : i32
    return %c0_i32, %c0_i32_0 : i32, i32
  }
}

</mosaic_0001>

<llo_original>
// kernel: tile.9
$region0: #{tile.9}
  %s0 = inlined_call_operand.vmem [shape: f32[4,2,64], index: 0, kind: input, shape index: {}]
  %s1 = inlined_call_operand.vmem [shape: f32[4,128], index: 1, kind: output, shape index: {}]
  $region1: #{tile.9} parent=0
    #allocation0 [shape = 'u8[4096]{0}', space=vmem, size = 0x1000, scoped, tag = 'scoped mem for output reshape']
    #allocation1 [shape = 'u8[16384]{0}', space=vmem, size = 0x4000, scoped, tag = 'scoped mem for input reshape']
    %s3 = sshll.u32 1, 2
    %s4 = ssub.s32 %s3, 1
    %s5 = smul.addr 2, 3
    %s6 = scalar_lea.vmem %s0, %s5
    %v7 = vld [vmem:[%s6] sm:%s4]
    %s8 = scalar_lea.vmem [#allocation1], 24
    %9 = vst [vmem:[%s8] sm:%s4] %v7
    %s10 = smul.addr 2, 2
    %s11 = scalar_lea.vmem %s0, %s10
    %v12 = vld [vmem:[%s11] sm:%s4]
    %s13 = scalar_lea.vmem [#allocation1], 16
    %14 = vst [vmem:[%s13] sm:%s4] %v12
    %s15 = scalar_lea.vmem %s0, 2
    %v16 = vld [vmem:[%s15] sm:%s4]
    %s17 = scalar_lea.vmem [#allocation1], 8
    %18 = vst [vmem:[%s17] sm:%s4] %v16
    %v19 = vld [vmem:[%s0] sm:%s4]
    %20 = vst [vmem:[#allocation1] sm:%s4] %v19
    %v21 = vld [vmem:[#allocation1] ss:$8 sm:$0xf]
    %vm22 = vcmask 523264
    %23 = vst.msk [vmem:[#allocation0] sm:$0xf] %vm22, %v21
    %s24 = scalar_lea.vmem [#allocation1], 1
    %v25 = vld [vmem:[%s24] ss:$8 sm:$0xf]
    %26 = vrot.lane.b32.xlu0 %v25, 64
    %v27 = vpop.permute.xlu0 %26
    %vm28 = vcmask 1048064
    %29 = vst.msk [vmem:[#allocation0] sm:$0xf] %vm28, %v27
    %s31 = sshll.u32 1, 4
    %s32 = ssub.s32 %s31, 1
    %v34 = vld [vmem:[#allocation0] sm:%s32]
    %s35 = sshll.u32 1, 4
    %s36 = ssub.s32 %s35, 1
    %37 = vst [vmem:[%s1] sm:%s36] %v34

// kernel: se_gate.1
$region0: #{se_gate.1}
  #allocation0 [shape = 'u32[]', space=smem, size = 0x4, offset = 0x4, fixed_abs, tag = 'smem constant byte address 0x4 - core index']
  #allocation1 [shape = 'u32[144,128]{1,0:T(1,128)}', space=vmem, size = 0x12000, scoped, tag = 'internal scratch']
  #allocation2 [shape = 'f32[1,128]{1,0:T(1,128)}', space=vmem, size = 0x200, scoped, tag = 'scratch operand']
  %s0 = inlined_call_operand.vmem [shape: f32[2048,128], index: 0, kind: input, shape index: {}]
  %s1 = inlined_call_operand.vmem [shape: f32[4,128], index: 1, kind: input, shape index: {}]
  %s2 = inlined_call_operand.vmem [shape: f32[4,64], index: 2, kind: input, shape index: {}]
  %s3 = inlined_call_operand.hbm [shape: f32[1,64], index: 3, kind: output, shape index: {0}]
  %s4 = inlined_call_operand.hbm [shape: f32[1,64], index: 4, kind: output, shape index: {1}]
  %5 = xla_tuple %s3, %s4
  %s6 = sld [smem:[#allocation0]]
  $region61: #{se_gate.1} parent=0
    _
  %s8 = ssub.s32 1, %s6
  %s9 = scalar_select 0, %s8, %s6
  $region1: #{se_gate.1} parent=0
    #allocation3 [shape = 'u8[512]{0}', space=vmem, size = 0x400, scoped, tag = 'output window, operand 0, single buffered']
    #allocation4 [shape = 's32[2]{0}', space=sflag, size = 0x8, scoped, tag = 'scoped memory for se_gate.1']
    #allocation5 [shape = 'u8[512]{0}', space=vmem, size = 0x400, scoped, tag = 'output window, operand 1, single buffered']
    #allocation6 [shape = 's32[1]{0}', space=sflag, size = 0x4, scoped, tag = 'scoped memory for se_gate.1']
    %10 = vsyncpa [#allocation4], 0
    %11 = vsyncpa [#allocation6], 0
    loop: start=0, step=1, limit=6
    $region2: #{se_gate.1} parent=1 // loop_pre_header
      _
    $region3: #{se_gate.1} parent=1 // loop_header
      %s13 = sphi 0, %s17
      %p14 = scmp.ge.s32.totalorder %s13, 6
      %s23 = sphi 0, %s25
      %s26 = sphi 0, %s23
      %s27 = sphi 0, %s26
      %s43 = sphi 0, %s27
      %s47 = sphi 0, %s47
      %s49 = sphi 0, %s47
      %s50 = sphi 0, %s49
      %s64 = sphi 0, %s50
      %s68 = sphi 0, %s68
      %s70 = sphi 0, %s68
      %s71 = sphi 0, %s70
      %s85 = sphi 0, %s71
      %s89 = sphi 0, %s89
      %s91 = sphi 0, %s89
      %s92 = sphi 0, %s91
      %s106 = sphi 0, %s92
      %s110 = sphi 0, %s110
      %s112 = sphi 0, %s110
      %s113 = sphi 0, %s112
      %s127 = sphi 0, %s113
    $region4: #{se_gate.1} parent=1 // loop_header_branch
      %16 = sbr.rel (%p14) target = $region8
    $region5: #{se_gate.1} parent=1 // loop_body
      %s18 = ssub.s32 %s13, 1
      %s19 = ssub.s32 %s13, 2
      %s20 = sadd.s32 %s13, 1
      %s21 = ssub.s32 %s13, %s20
      %p22 = scmp.eq.s32.totalorder %s21, 0
      %s24 = sadd.s32 %s23, 1
      %s25 = scalar_select %p22, %s23, %s24
      %p28 = pneg %p22
      %p29 = scmp.eq.s32.totalorder %s13, 3
      %p30 = por %p28, %p29
      %p31 = scmp.ne.s32.totalorder %s23, %s26
      %p32 = scmp.eq.s32.totalorder %s13, 0
      %p33 = por %p31, %p32
      %p34 = scmp.ne.s32.totalorder %s23, %s26
      %p35 = scmp.eq.s32.totalorder %s18, 3
      %p36 = por %p34, %p35
      %p37 = scmp.ne.s32.totalorder %s26, %s27
      %p38 = scmp.eq.s32.totalorder %s18, 0
      %p39 = por %p37, %p38
      %p40 = scmp.ne.s32.totalorder %s26, %s27
      %p41 = scmp.eq.s32.totalorder %s19, 3
      %p42 = por %p40, %p41
      %p44 = scmp.ne.s32.totalorder %s27, %s43
      %p45 = scmp.eq.s32.totalorder %s19, 0
      %p46 = por %p44, %p45
      %s48 = sadd.s32 %s47, 1
      %p51 = scmp.eq.s32.totalorder %s13, 3
      %p52 = scmp.ne.s32.totalorder %s47, %s49
      %p53 = scmp.eq.s32.totalorder %s13, 0
      %p54 = por %p52, %p53
      %p55 = scmp.ne.s32.totalorder %s47, %s49
      %p56 = scmp.eq.s32.totalorder %s18, 3
      %p57 = por %p55, %p56
      %p58 = scmp.ne.s32.totalorder %s49, %s50
      %p59 = scmp.eq.s32.totalorder %s18, 0
      %p60 = por %p58, %p59
      %p61 = scmp.ne.s32.totalorder %s49, %s50
      %p62 = scmp.eq.s32.totalorder %s19, 3
      %p63 = por %p61, %p62
      %p65 = scmp.ne.s32.totalorder %s50, %s64
      %p66 = scmp.eq.s32.totalorder %s19, 0
      %p67 = por %p65, %p66
      %s69 = sadd.s32 %s68, 1
      %p72 = scmp.eq.s32.totalorder %s13, 3
      %p73 = scmp.ne.s32.totalorder %s68, %s70
      %p74 = scmp.eq.s32.totalorder %s13, 0
      %p75 = por %p73, %p74
      %p76 = scmp.ne.s32.totalorder %s68, %s70
      %p77 = scmp.eq.s32.totalorder %s18, 3
      %p78 = por %p76, %p77
      %p79 = scmp.ne.s32.totalorder %s70, %s71
      %p80 = scmp.eq.s32.totalorder %s18, 0
      %p81 = por %p79, %p80
      %p82 = scmp.ne.s32.totalorder %s70, %s71
      %p83 = scmp.eq.s32.totalorder %s19, 3
      %p84 = por %p82, %p83
      %p86 = scmp.ne.s32.totalorder %s71, %s85
      %p87 = scmp.eq.s32.totalorder %s19, 0
      %p88 = por %p86, %p87
      %s90 = sadd.s32 %s89, 1
      %p93 = scmp.eq.s32.totalorder %s13, 3
      %p94 = scmp.ne.s32.totalorder %s89, %s91
      %p95 = scmp.eq.s32.totalorder %s13, 0
      %p96 = por %p94, %p95
      %p97 = scmp.ne.s32.totalorder %s89, %s91
      %p98 = scmp.eq.s32.totalorder %s18, 3
      %p99 = por %p97, %p98
      %p100 = scmp.ne.s32.totalorder %s91, %s92
      %p101 = scmp.eq.s32.totalorder %s18, 0
      %p102 = por %p100, %p101
      %p103 = scmp.ne.s32.totalorder %s91, %s92
      %p104 = scmp.eq.s32.totalorder %s19, 3
      %p105 = por %p103, %p104
      %p107 = scmp.ne.s32.totalorder %s92, %s106
      %p108 = scmp.eq.s32.totalorder %s19, 0
      %p109 = por %p107, %p108
      %s111 = sadd.s32 %s110, 1
      %p114 = scmp.eq.s32.totalorder %s13, 3
      %p115 = scmp.ne.s32.totalorder %s110, %s112
      %p116 = scmp.eq.s32.totalorder %s13, 0
      %p117 = por %p115, %p116
      %p118 = scmp.ne.s32.totalorder %s110, %s112
      %p119 = scmp.eq.s32.totalorder %s18, 3
      %p120 = por %p118, %p119
      %p121 = scmp.ne.s32.totalorder %s112, %s113
      %p122 = scmp.eq.s32.totalorder %s18, 0
      %p123 = por %p121, %p122
      %p124 = scmp.ne.s32.totalorder %s112, %s113
      %p125 = scmp.eq.s32.totalorder %s19, 3
      %p126 = por %p124, %p125
      %p128 = scmp.ne.s32.totalorder %s113, %s127
      %p129 = scmp.eq.s32.totalorder %s19, 0
      %p130 = por %p128, %p129
      %p131 = scmp.le.s32.totalorder 1, %s13
      %p132 = scmp.lt.s32.totalorder %s13, 5
      %p133 = pnand %p131, %p132
      %p134 = pneg %p133
      // Predicated region
      $region9: #{se_gate.1} parent=5 // pred_check
        _
      $region10: #{se_gate.1} parent=5 // pred_check_branch
        %136 = sbr.rel (%p133) target = $region12
      $region11: #{se_gate.1} parent=5 // pred_region
        %s137 = ssub.s32 %s13, 1
        // Predicated region
        $region13: #{se_gate.1} parent=11 // pred_check
          %p138 = pneg %p60
        $region14: #{se_gate.1} parent=11 // pred_check_branch
          %140 = sbr.rel (%p138) target = $region16
        $region15: #{se_gate.1} parent=11 // pred_region
          _
        $region16: #{se_gate.1} parent=11 // pred_fallthru
          _
        // Predicated region
        $region17: #{se_gate.1} parent=11 // pred_check
          %p141 = pneg %p81
        $region18: #{se_gate.1} parent=11 // pred_check_branch
          %143 = sbr.rel (%p141) target = $region20
        $region19: #{se_gate.1} parent=11 // pred_region
          _
        $region20: #{se_gate.1} parent=11 // pred_fallthru
          _
      $region12: #{se_gate.1} parent=5 // pred_fallthru
        _
      %p144 = scmp.lt.s32.totalorder %s13, 4
      // Predicated region
      $region21: #{se_gate.1} parent=5 // pred_check
        %p145 = pneg %p144
      $region22: #{se_gate.1} parent=5 // pred_check_branch
        %147 = sbr.rel (%p145) target = $region24
      $region23: #{se_gate.1} parent=5 // pred_region
        // Predicated region
        $region25: #{se_gate.1} parent=23 // pred_check
          %p148 = pneg %p33
        $region26: #{se_gate.1} parent=23 // pred_check_branch
          %150 = sbr.rel (%p148) target = $region28
        $region27: #{se_gate.1} parent=23 // pred_region
          %s151 = smul.u32 64, %s13
          %p152 = scmp.lt.s32.totalorder %s151, 255
          %s153 = scalar_select %p152, %s151, 255
          %s154 = smul.addr %s153, 8
          %s155 = scalar_lea.vmem %s0, %s154
          %s156 = smul.u32 64, %s13
        $region28: #{se_gate.1} parent=23 // pred_fallthru
          _
      $region24: #{se_gate.1} parent=5 // pred_fallthru
        _
      %p157 = scmp.le.s32.totalorder 1, %s13
      %p158 = scmp.lt.s32.totalorder %s13, 5
      %p159 = pnand %p157, %p158
      %p160 = pneg %p159
      // Predicated region
      $region29: #{se_gate.1} parent=5 // pred_check
        _
      $region30: #{se_gate.1} parent=5 // pred_check_branch
        %162 = sbr.rel (%p159) target = $region32
      $region31: #{se_gate.1} parent=5 // pred_region
        %s163 = ssub.s32 %s13, 1
        %s164 = smul.u32 64, %s18
        %p165 = scmp.lt.s32.totalorder %s164, 255
        %s166 = scalar_select %p165, %s164, 255
        %s167 = smul.addr %s166, 8
        %s168 = scalar_lea.vmem %s0, %s167
        %p169 = pneg %p39
        %p170 = pneg %p36
        %p171 = pneg %p60
        %p172 = pneg %p57
        %p173 = pneg %p81
        %p174 = pneg %p78
        %p175 = pneg %p102
        %p176 = pneg %p99
        %p177 = pneg %p123
        %p178 = pneg %p120
        %s179 = smul.u32 64, %s18
        %p180 = scmp.lt.s32.totalorder %s179, 255
        %s181 = scalar_select %p180, %s179, 255
        %s182 = smul.addr %s181, 8
        %s183 = scalar_lea.vmem %s0, %s182
        %s184 = smul.u32 64, %s18
        %p185 = scmp.eq.s32.totalorder %s18, 0
        // Predicated region
        $region33: #{se_gate.1} parent=31 // pred_check
          %p186 = pneg %p185
        $region34: #{se_gate.1} parent=31 // pred_check_branch
          %188 = sbr.rel (%p186) target = $region36
        $region35: #{se_gate.1} parent=31 // pred_region
          %189 = vst [vmem:[#allocation2] sm:$0x1] 0.0
        $region36: #{se_gate.1} parent=31 // pred_fallthru
          _
        %v190 = vld [vmem:[%s183] sm:$0xff]
        %v191 = vld [vmem:[%s183 + $0x8] sm:$0xff]
        %v192 = vld [vmem:[%s183 + $0x10] sm:$0xff]
        %v193 = vld [vmem:[%s183 + $0x18] sm:$0xff]
        %v194 = vld [vmem:[%s183 + $0x20] sm:$0xff]
        %v195 = vld [vmem:[%s183 + $0x28] sm:$0xff]
        %v196 = vld [vmem:[%s183 + $0x30] sm:$0xff]
        %v197 = vld [vmem:[%s183 + $0x38] sm:$0xff]
        %v198 = vld [vmem:[%s183 + $0x40] sm:$0xff]
        %v199 = vld [vmem:[%s183 + $0x48] sm:$0xff]
        %v200 = vld [vmem:[%s183 + $0x50] sm:$0xff]
        %v201 = vld [vmem:[%s183 + $0x58] sm:$0xff]
        %v202 = vld [vmem:[%s183 + $0x60] sm:$0xff]
        %v203 = vld [vmem:[%s183 + $0x68] sm:$0xff]
        %v204 = vld [vmem:[%s183 + $0x70] sm:$0xff]
        %v205 = vld [vmem:[%s183 + $0x78] sm:$0xff]
        %v206 = vld [vmem:[%s183 + $0x80] sm:$0xff]
        %v207 = vld [vmem:[%s183 + $0x88] sm:$0xff]
        %v208 = vld [vmem:[%s183 + $0x90] sm:$0xff]
        %v209 = vld [vmem:[%s183 + $0x98] sm:$0xff]
        %v210 = vld [vmem:[%s183 + $0xa0] sm:$0xff]
        %v211 = vld [vmem:[%s183 + $0xa8] sm:$0xff]
        %v212 = vld [vmem:[%s183 + $0xb0] sm:$0xff]
        %v213 = vld [vmem:[%s183 + $0xb8] sm:$0xff]
        %v214 = vld [vmem:[%s183 + $0xc0] sm:$0xff]
        %v215 = vld [vmem:[%s183 + $0xc8] sm:$0xff]
        %v216 = vld [vmem:[%s183 + $0xd0] sm:$0xff]
        %v217 = vld [vmem:[%s183 + $0xd8] sm:$0xff]
        %v218 = vld [vmem:[%s183 + $0xe0] sm:$0xff]
        %v219 = vld [vmem:[%s183 + $0xe8] sm:$0xff]
        %v220 = vld [vmem:[%s183 + $0xf0] sm:$0xff]
        %v221 = vld [vmem:[%s183 + $0xf8] sm:$0xff]
        %v222 = vld [vmem:[%s183 + $0x100] sm:$0xff]
        %v223 = vld [vmem:[%s183 + $0x108] sm:$0xff]
        %v224 = vld [vmem:[%s183 + $0x110] sm:$0xff]
        %v225 = vld [vmem:[%s183 + $0x118] sm:$0xff]
        %v226 = vld [vmem:[%s183 + $0x120] sm:$0xff]
        %v227 = vld [vmem:[%s183 + $0x128] sm:$0xff]
        %v228 = vld [vmem:[%s183 + $0x130] sm:$0xff]
        %v229 = vld [vmem:[%s183 + $0x138] sm:$0xff]
        %v230 = vld [vmem:[%s183 + $0x140] sm:$0xff]
        %v231 = vld [vmem:[%s183 + $0x148] sm:$0xff]
        %v232 = vld [vmem:[%s183 + $0x150] sm:$0xff]
        %v233 = vld [vmem:[%s183 + $0x158] sm:$0xff]
        %v234 = vld [vmem:[%s183 + $0x160] sm:$0xff]
        %v235 = vld [vmem:[%s183 + $0x168] sm:$0xff]
        %v236 = vld [vmem:[%s183 + $0x170] sm:$0xff]
        %v237 = vld [vmem:[%s183 + $0x178] sm:$0xff]
        %v238 = vld [vmem:[%s183 + $0x180] sm:$0xff]
        %v239 = vld [vmem:[%s183 + $0x188] sm:$0xff]
        %v240 = vld [vmem:[%s183 + $0x190] sm:$0xff]
        %v241 = vld [vmem:[%s183 + $0x198] sm:$0xff]
        %v242 = vld [vmem:[%s183 + $0x1a0] sm:$0xff]
        %v243 = vld [vmem:[%s183 + $0x1a8] sm:$0xff]
        %v244 = vld [vmem:[%s183 + $0x1b0] sm:$0xff]
        %v245 = vld [vmem:[%s183 + $0x1b8] sm:$0xff]
        %v246 = vld [vmem:[%s183 + $0x1c0] sm:$0xff]
        %v247 = vld [vmem:[%s183 + $0x1c8] sm:$0xff]
        %v248 = vld [vmem:[%s183 + $0x1d0] sm:$0xff]
        %v249 = vld [vmem:[%s183 + $0x1d8] sm:$0xff]
        %v250 = vld [vmem:[%s183 + $0x1e0] sm:$0xff]
        %v251 = vld [vmem:[%s183 + $0x1e8] sm:$0xff]
        %v252 = vld [vmem:[%s183 + $0x1f0] sm:$0xff]
        %v253 = vld [vmem:[%s183 + $0x1f8] sm:$0xff]
        %v254 = vld [vmem:[#allocation2] sm:$0x1]
        %v255 = vadd.f32 %v190, %v191
        %v256 = vadd.f32 %v255, %v192
        %v257 = vadd.f32 %v256, %v193
        %v258 = vadd.f32 %v257, %v194
        %v259 = vadd.f32 %v258, %v195
        %v260 = vadd.f32 %v259, %v196
        %v261 = vadd.f32 %v260, %v197
        %v262 = vadd.f32 %v261, %v198
        %v263 = vadd.f32 %v262, %v199
        %v264 = vadd.f32 %v263, %v200
        %v265 = vadd.f32 %v264, %v201
        %v266 = vadd.f32 %v265, %v202
        %v267 = vadd.f32 %v266, %v203
        %v268 = vadd.f32 %v267, %v204
        %v269 = vadd.f32 %v268, %v205
        %v270 = vadd.f32 %v269, %v206
        %v271 = vadd.f32 %v270, %v207
        %v272 = vadd.f32 %v271, %v208
        %v273 = vadd.f32 %v272, %v209
        %v274 = vadd.f32 %v273, %v210
        %v275 = vadd.f32 %v274, %v211
        %v276 = vadd.f32 %v275, %v212
        %v277 = vadd.f32 %v276, %v213
        %v278 = vadd.f32 %v277, %v214
        %v279 = vadd.f32 %v278, %v215
        %v280 = vadd.f32 %v279, %v216
        %v281 = vadd.f32 %v280, %v217
        %v282 = vadd.f32 %v281, %v218
        %v283 = vadd.f32 %v282, %v219
        %v284 = vadd.f32 %v283, %v220
        %v285 = vadd.f32 %v284, %v221
        %v286 = vadd.f32 %v285, %v222
        %v287 = vadd.f32 %v286, %v223
        %v288 = vadd.f32 %v287, %v224
        %v289 = vadd.f32 %v288, %v225
        %v290 = vadd.f32 %v289, %v226
        %v291 = vadd.f32 %v290, %v227
        %v292 = vadd.f32 %v291, %v228
        %v293 = vadd.f32 %v292, %v229
        %v294 = vadd.f32 %v293, %v230
        %v295 = vadd.f32 %v294, %v231
        %v296 = vadd.f32 %v295, %v232
        %v297 = vadd.f32 %v296, %v233
        %v298 = vadd.f32 %v297, %v234
        %v299 = vadd.f32 %v298, %v235
        %v300 = vadd.f32 %v299, %v236
        %v301 = vadd.f32 %v300, %v237
        %v302 = vadd.f32 %v301, %v238
        %v303 = vadd.f32 %v302, %v239
        %v304 = vadd.f32 %v303, %v240
        %v305 = vadd.f32 %v304, %v241
        %v306 = vadd.f32 %v305, %v242
        %v307 = vadd.f32 %v306, %v243
        %v308 = vadd.f32 %v307, %v244
        %v309 = vadd.f32 %v308, %v245
        %v310 = vadd.f32 %v309, %v246
        %v311 = vadd.f32 %v310, %v247
        %v312 = vadd.f32 %v311, %v248
        %v313 = vadd.f32 %v312, %v249
        %v314 = vadd.f32 %v313, %v250
        %v315 = vadd.f32 %v314, %v251
        %v316 = vadd.f32 %v315, %v252
        %v317 = vadd.f32 %v316, %v253
        %v318 = vrot.slane %v317, 4
        %v319 = vadd.f32 %v317, %v318
        %v320 = vrot.slane %v319, 2
        %v321 = vadd.f32 %v319, %v320
        %v322 = vrot.slane %v321, 1
        %v323 = vadd.f32 %v321, %v322
        %v324 = vadd.f32 %v254, %v323
        %325 = vst [vmem:[#allocation2] sm:$0x1] %v324
        %p326 = scmp.eq.s32.totalorder %s18, 3
        // Predicated region
        $region37: #{se_gate.1} parent=31 // pred_check
          %p327 = pneg %p326
        $region38: #{se_gate.1} parent=31 // pred_check_branch
          %329 = sbr.rel (%p327) target = $region40
        $region39: #{se_gate.1} parent=31 // pred_region
          %v330 = vld [vmem:[#allocation2] sm:$0x1]
          %v331 = vmul.f32 %v330, 0.00024414063
          %v332 = vld [vmem:[%s1] sm:$0xf]
          %v334 = vlaneseq
          %v335 = vshrl.u32 %v334, 7
          %v336 = vsub.s32 0, %v335
          %v337 = vrot.slane %v331, %v336
          %v339 = vmul.f32 %v332, %v337
          %vm340 = vcmask 1043456
          %v341 = vsel %vm340, %v339, 0.0
          %342 = vadd.xlane.f32.xlu0 %v341
          %v343 = vpop.xlane.xlu0 %342
          %v344 = vmax.f32 %v343, 0.0
          %v345 = vld [vmem:[%s2] sm:$0xf]
          %v346 = vmul.f32 %v345, %v344
          %vm347 = vcmask 519168
          %v348 = vsel %vm347, %v346, 0.0
          %v349 = vrot.slane %v348, 4
          %v350 = vadd.f32 %v348, %v349
          %v351 = vrot.slane %v350, 2
          %v352 = vadd.f32 %v350, %v351
          %v353 = vrot.slane %v352, 1
          %v354 = vadd.f32 %v352, %v353
          %v355 = vsub.f32 %v354, %v354
          %v356 = vmul.f32 %v355, 1.442695
          %v357 = vpow.pop %v356
          %v358 = vrcp.pop %v357
          %v359 = vmul.f32 %v357, %v358
          %vm360 = vcmask 516096
          %361 = vst.msk [vmem:[#allocation5] sm:$0x1] %vm360, %v354
          %362 = vst.msk [vmem:[#allocation3] sm:$0x1] %vm360, %v359
        $region40: #{se_gate.1} parent=31 // pred_fallthru
          _
        // Predicated region
        $region41: #{se_gate.1} parent=31 // pred_check
          %p363 = pneg %p99
        $region42: #{se_gate.1} parent=31 // pred_check_branch
          %365 = sbr.rel (%p363) target = $region44
        $region43: #{se_gate.1} parent=31 // pred_region
          %s367 = ssub.s32 16, 16
          %368 = vsyncadd [#allocation4], %s367
          %s370 = sshll.u32 [#allocation3], 4
          %s371 = int_to_ptr.vmem [resolvable:$true] %s370
          %373 = dma.vmem_to_hbm [thread:$0]  %s371, 16, %s3, [#allocation4]
        $region44: #{se_gate.1} parent=31 // pred_fallthru
          _
        // Predicated region
        $region45: #{se_gate.1} parent=31 // pred_check
          %p374 = pneg %p120
        $region46: #{se_gate.1} parent=31 // pred_check_branch
          %376 = sbr.rel (%p374) target = $region48
        $region47: #{se_gate.1} parent=31 // pred_region
          %s378 = ssub.s32 16, 16
          %379 = vsyncadd [#allocation6], %s378
          %s381 = sshll.u32 [#allocation5], 4
          %s382 = int_to_ptr.vmem [resolvable:$true] %s381
          %384 = dma.vmem_to_hbm [thread:$0]  %s382, 16, %s4, [#allocation6]
        $region48: #{se_gate.1} parent=31 // pred_fallthru
          _
        // Predicated region
        $region49: #{se_gate.1} parent=31 // pred_check
          %p385 = pneg %p99
        $region50: #{se_gate.1} parent=31 // pred_check_branch
          %387 = sbr.rel (%p385) target = $region52
        $region51: #{se_gate.1} parent=31 // pred_region
          %388 = dma.done [#allocation4], 16
        $region52: #{se_gate.1} parent=31 // pred_fallthru
          _
        // Predicated region
        $region53: #{se_gate.1} parent=31 // pred_check
          %p389 = pneg %p120
        $region54: #{se_gate.1} parent=31 // pred_check_branch
          %391 = sbr.rel (%p389) target = $region56
        $region55: #{se_gate.1} parent=31 // pred_region
          %392 = dma.done [#allocation6], 16
        $region56: #{se_gate.1} parent=31 // pred_fallthru
          _
      $region32: #{se_gate.1} parent=5 // pred_fallthru
        _
      %p393 = scmp.le.s32.totalorder 2, %s13
      // Predicated region
      $region57: #{se_gate.1} parent=5 // pred_check
        %p394 = pneg %p393
      $region58: #{se_gate.1} parent=5 // pred_check_branch
        %396 = sbr.rel (%p394) target = $region60
      $region59: #{se_gate.1} parent=5 // pred_region
        %s397 = ssub.s32 %s13, 2
      $region60: #{se_gate.1} parent=5 // pred_fallthru
        _
    $region6: #{se_gate.1} parent=1 // loop_footer
      %s17 = sadd.s32 1, %s13
    $region7: #{se_gate.1} parent=1 // loop_footer_branch
      %12 = sbr.rel target = $region3
    $region8: #{se_gate.1} parent=1 // loop_exit
      _
    %398 = vsyncpa [#allocation4], 1
    %s399 = scalar_lea.sflag [#allocation4], 1
    %400 = vsyncpa %s399, 1
    %401 = vsyncpa [#allocation6], 1

</llo_original>
